<compile_context>
chip_gen: v6e
topology: v6e:2x2x1
jax: 0.10.0
libtpu: 0.0.40
codegen_flags: <defaults>
</compile_context>

<pallas_src>
import functools
import numpy as np

import jax
import jax.numpy as jnp
from jax.experimental import pallas as pl
from jax.experimental.pallas import tpu as pltpu


# ----------------------------------------------------------------------------
# Fused kernel (feature-major): all activations are (features, tm), batch on
# lanes.  x -> blockdiag enc L1 -> GELU -> blockdiag enc L2 -> GELU = latent
#           -> dec L1 -> GELU -> dec L2 -> GELU = decoded
# ----------------------------------------------------------------------------
def _gelu_exact(x):
    # PyTorch nn.GELU() default: 0.5 * x * (1 + erf(x / sqrt(2)))
    return 0.5 * x * (1.0 + jax.lax.erf(x * (1.0 / np.sqrt(2.0))))


def fused_forward_kernel(x_ref,
                         w1t_ref, b1_ref, w2t_ref, b2_ref,
                         wd1t_ref, bd1_ref, wd2t_ref, bd2_ref,
                         out_ref):
    x = x_ref[...]                                    # (tm, in_dim) batch-major block

    # Fold the input transpose into the first matmul: contract the last dims
    # of both operands (W1^T . x^T) on the MXU -> (sum_h_pad, tm).
    dn = (((1,), (1,)), ((), ()))
    h = jax.lax.dot_general(w1t_ref[...], x, dn,
                            preferred_element_type=jnp.float32) + b1_ref[...]
    h = _gelu_exact(h)                                # (sum_h_pad, tm)
    # TODO(synk): nn.Dropout skipped (identity in eval / inference mode).

    lat = jnp.dot(w2t_ref[...], h,
                  preferred_element_type=jnp.float32) + b2_ref[...]
    lat = _gelu_exact(lat)                            # (nlat_pad, tm)

    hd = jnp.dot(wd1t_ref[...], lat,
                 preferred_element_type=jnp.float32) + bd1_ref[...]
    hd = _gelu_exact(hd)                              # (hid_pad, tm)

    dec = jnp.dot(wd2t_ref[...], hd,
                  preferred_element_type=jnp.float32) + bd2_ref[...]
    dec = _gelu_exact(dec)                            # (out_pad, tm)

    out_pad = dec.shape[0]                            # static
    out_ref[0:out_pad, :] = dec.astype(out_ref.dtype)       # lane-dense store
    out_ref[out_pad:, :] = lat.astype(out_ref.dtype)        # lane-dense store


def _choose_tm(batch):
    """Row tile over batch (batch rides the lane axis in the kernel)."""
    if batch <= 256:
        return batch                     # one whole-array block (full-dim legal)
    # Large batches: big lane-dense tiles (multiple of 128), capped near
    # batch/2 so the grid always has >= 2 parallel steps (v7x megacore), and
    # capped at 8192 so double-buffered VMEM stays a few MiB.
    tm = min(8192, max(128, (batch // 2 // 128) * 128))
    return tm


def concept_autoencoder_forward(x, weights, out_dim, nlat):
    """One pallas_call for the full forward.  Returns (decoded, latent)."""
    (w1t, b1, w2t, b2, wd1t, bd1, wd2t, bd2) = weights
    batch, in_dim = x.shape
    sum_h_p = w1t.shape[0]
    nlat_p = w2t.shape[0]
    hid_p = wd1t.shape[0]
    out_p = wd2t.shape[0]
    slab_rows = out_p + nlat_p

    tm = _choose_tm(batch)
    grid = (pl.cdiv(batch, tm),)

    flops = 2 * batch * (in_dim * sum_h_p + sum_h_p * nlat_p
                         + nlat_p * hid_p + hid_p * out_p)
    transcendentals = batch * (sum_h_p + nlat_p + hid_p + out_p)
    bytes_accessed = 4 * (batch * in_dim + slab_rows * batch
                          + sum(int(np.prod(w.shape)) for w in weights))

    out = pl.pallas_call(
        fused_forward_kernel,
        out_shape=jax.ShapeDtypeStruct((slab_rows, batch), jnp.float32),
        grid=grid,
        in_specs=[pl.BlockSpec((tm, in_dim), lambda i: (i, 0))]
                 # weights/biases: same block every step -> resident in VMEM
                 + [pl.BlockSpec(w.shape, lambda i: (0, 0)) for w in weights],
        out_specs=pl.BlockSpec((slab_rows, tm), lambda i: (0, i)),
        compiler_params=pltpu.CompilerParams(
            dimension_semantics=("parallel",)),
        cost_estimate=pl.CostEstimate(flops=flops,
                                      transcendentals=transcendentals,
                                      bytes_accessed=bytes_accessed),
    )(x, *weights)

    # Slice the fused slab apart and restore batch-major layout (tiny XLA ops).
    decoded = out[:out_dim, :].T
    latent = out[out_p:out_p + nlat, :].T
    return decoded, latent


# ----------------------------------------------------------------------------
# Parameter construction (mirrors PyTorch module shapes) + one-time packing.
# ----------------------------------------------------------------------------
def _linear_params(key, fan_in, fan_out):
    # PyTorch nn.Linear default init: U(-1/sqrt(fan_in), 1/sqrt(fan_in)).
    kw, kb = jax.random.split(key)
    bound = 1.0 / np.sqrt(fan_in)
    w = jax.random.uniform(kw, (fan_in, fan_out), jnp.float32, -bound, bound)  # [in, out]
    b = jax.random.uniform(kb, (1, fan_out), jnp.float32, -bound, bound)
    return w, b


def init_concept_autoencoder(key, concept_dims, latent_dim=4):
    params = {"encoders": [], "decoder": {}}
    for dim in concept_dims:
        key, k1, k2 = jax.random.split(key, 3)
        hidden = max(dim, latent_dim)
        w1, b1 = _linear_params(k1, dim, hidden)
        w2, b2 = _linear_params(k2, hidden, latent_dim)
        params["encoders"].append({"w1": w1, "b1": b1, "w2": w2, "b2": b2})
    total = sum(concept_dims)
    key, k1, k2 = jax.random.split(key, 3)
    w1, b1 = _linear_params(k1, len(concept_dims) * latent_dim, total // 2)
    w2, b2 = _linear_params(k2, total // 2, total)
    params["decoder"] = {"w1": w1, "b1": b1, "w2": w2, "b2": b2}
    return params


def _pad_up(n, m=8):
    return ((n + m - 1) // m) * m


def pack_params(params, concept_dims, latent_dim):
    """Pack per-concept encoders into transposed (feature-major) block-diagonal
    matrices, padded to multiples of 8 on every feature axis (done once)."""
    n = len(concept_dims)
    hiddens = [max(d, latent_dim) for d in concept_dims]
    in_dim = sum(concept_dims)
    sum_h, nlat = sum(hiddens), n * latent_dim
    hid, out_dim = in_dim // 2, in_dim
    sum_h_p, nlat_p, hid_p, out_p = map(_pad_up, (sum_h, nlat, hid, out_dim))

    w1t = np.zeros((sum_h_p, in_dim), np.float32)
    b1 = np.zeros((sum_h_p, 1), np.float32)
    w2t = np.zeros((nlat_p, sum_h_p), np.float32)
    b2 = np.zeros((nlat_p, 1), np.float32)
    ri = rh = 0
    for i, (d, h) in enumerate(zip(concept_dims, hiddens)):
        p = params["encoders"][i]
        w1t[rh:rh + h, ri:ri + d] = np.asarray(p["w1"]).T
        b1[rh:rh + h, 0] = np.asarray(p["b1"]).reshape(-1)
        w2t[i * latent_dim:(i + 1) * latent_dim, rh:rh + h] = np.asarray(p["w2"]).T
        b2[i * latent_dim:(i + 1) * latent_dim, 0] = np.asarray(p["b2"]).reshape(-1)
        ri += d
        rh += h

    dec = params["decoder"]
    wd1t = np.zeros((hid_p, nlat_p), np.float32)
    bd1 = np.zeros((hid_p, 1), np.float32)
    wd2t = np.zeros((out_p, hid_p), np.float32)
    bd2 = np.zeros((out_p, 1), np.float32)
    wd1t[:hid, :nlat] = np.asarray(dec["w1"]).T
    bd1[:hid, 0] = np.asarray(dec["b1"]).reshape(-1)
    wd2t[:out_dim, :hid] = np.asarray(dec["w2"]).T
    bd2[:out_dim, 0] = np.asarray(dec["b2"]).reshape(-1)

    return tuple(jnp.asarray(a) for a in
                 (w1t, b1, w2t, b2, wd1t, bd1, wd2t, bd2))


# Pure-JAX reference (unpacked, per-concept) for correctness verification.
def _reference_forward(x, params, concept_dims):
    def gelu(v):
        return 0.5 * v * (1.0 + jax.scipy.special.erf(v / np.sqrt(2.0)))

    def block(v, p):
        h = gelu(v @ p["w1"] + p["b1"])
        return gelu(h @ p["w2"] + p["b2"])

    offsets = np.cumsum([0] + list(concept_dims))
    enc = [block(x[:, offsets[i]:offsets[i + 1]], params["encoders"][i])
           for i in range(len(concept_dims))]
    latent = jnp.concatenate(enc, axis=1)
    decoded = block(latent, params["decoder"])
    return decoded, latent


if __name__ == "__main__":
    concept_dims = [3, 5, 8]          # sum = 16
    latent_dim = 4
    batch = 8

    key = jax.random.PRNGKey(0)
    key, kx, kp = jax.random.split(key, 3)
    x = jax.random.normal(kx, (batch, sum(concept_dims)), jnp.float32)
    params = init_concept_autoencoder(kp, concept_dims, latent_dim)
    packed = pack_params(params, concept_dims, latent_dim)

    out_dim = sum(concept_dims)
    nlat = len(concept_dims) * latent_dim

    fwd = jax.jit(concept_autoencoder_forward, static_argnums=(2, 3))
    decoded, latent = fwd(x, packed, out_dim, nlat)
    jax.block_until_ready((decoded, latent))

    ref_decoded, ref_latent = _reference_forward(x, params, concept_dims)
    assert decoded.shape == (batch, out_dim)
    assert latent.shape == (batch, nlat)
    np.testing.assert_allclose(np.asarray(decoded), np.asarray(ref_decoded),
                               rtol=1e-5, atol=1e-5)
    np.testing.assert_allclose(np.asarray(latent), np.asarray(ref_latent),
                               rtol=1e-5, atol=1e-5)

    print("KERNEL_OK")
</pallas_src>

<mosaic_0001>
module attributes {stable_mosaic.version = 11 : i64} {
  func.func @fused_forward_kernel(%arg0: i32, %arg1: memref<8x16xf32, #tpu.memory_space<vmem>>, %arg2: memref<24x16xf32, #tpu.memory_space<vmem>>, %arg3: memref<24x1xf32, #tpu.memory_space<vmem>>, %arg4: memref<16x24xf32, #tpu.memory_space<vmem>>, %arg5: memref<16x1xf32, #tpu.memory_space<vmem>>, %arg6: memref<8x16xf32, #tpu.memory_space<vmem>>, %arg7: memref<8x1xf32, #tpu.memory_space<vmem>>, %arg8: memref<16x8xf32, #tpu.memory_space<vmem>>, %arg9: memref<16x1xf32, #tpu.memory_space<vmem>>, %arg10: memref<32x8xf32, #tpu.memory_space<vmem>>) attributes {dimension_semantics = [#tpu.dimension_semantics<parallel>], iteration_bounds = array<i64: 1>, scalar_prefetch = 0 : i64, scratch_operands = 0 : i64, tpu.core_type = #tpu.core_type<tc>, window_params = [{transform_indices = @transform_0, window_bounds = array<i64: 8, 16>}, {pipeline_mode = #tpu.pipeline_mode<synchronous>, transform_indices = @transform_1, window_bounds = array<i64: 24, 16>}, {pipeline_mode = #tpu.pipeline_mode<synchronous>, transform_indices = @transform_2, window_bounds = array<i64: 24, 1>}, {pipeline_mode = #tpu.pipeline_mode<synchronous>, transform_indices = @transform_3, window_bounds = array<i64: 16, 24>}, {pipeline_mode = #tpu.pipeline_mode<synchronous>, transform_indices = @transform_4, window_bounds = array<i64: 16, 1>}, {pipeline_mode = #tpu.pipeline_mode<synchronous>, transform_indices = @transform_5, window_bounds = array<i64: 8, 16>}, {pipeline_mode = #tpu.pipeline_mode<synchronous>, transform_indices = @transform_6, window_bounds = array<i64: 8, 1>}, {pipeline_mode = #tpu.pipeline_mode<synchronous>, transform_indices = @transform_7, window_bounds = array<i64: 16, 8>}, {pipeline_mode = #tpu.pipeline_mode<synchronous>, transform_indices = @transform_8, window_bounds = array<i64: 16, 1>}, {transform_indices = @transform_9, window_bounds = array<i64: 32, 8>}]} {
    %c0 = arith.constant 0 : index
    %c0_0 = arith.constant 0 : index
    %0 = vector.load %arg1[%c0, %c0_0] : memref<8x16xf32, #tpu.memory_space<vmem>>, vector<8x16xf32>
    %c0_1 = arith.constant 0 : index
    %c0_2 = arith.constant 0 : index
    %1 = vector.load %arg2[%c0_1, %c0_2] : memref<24x16xf32, #tpu.memory_space<vmem>>, vector<24x16xf32>
    %cst = arith.constant dense<0.000000e+00> : vector<24x8xf32>
    %2 = tpu.matmul %1, %0, %cst {dimension_numbers = #tpu.dot_dimension_numbers<[1], [1], [0], [0], [0, 0, 1, 0], [], []>} : vector<24x16xf32>, vector<8x16xf32>, vector<24x8xf32> -> vector<24x8xf32>
    %c0_3 = arith.constant 0 : index
    %c0_4 = arith.constant 0 : index
    %3 = vector.load %arg3[%c0_3, %c0_4] : memref<24x1xf32, #tpu.memory_space<vmem>>, vector<24x1xf32>
    %4 = vector.broadcast %3 : vector<24x1xf32> to vector<24x8xf32>
    %5 = arith.addf %2, %4 : vector<24x8xf32>
    %cst_5 = arith.constant 5.000000e-01 : f32
    %6 = vector.broadcast %cst_5 : f32 to vector<24x8xf32>
    %7 = arith.mulf %6, %5 : vector<24x8xf32>
    %cst_6 = arith.constant 0.707106769 : f32
    %8 = vector.broadcast %cst_6 : f32 to vector<24x8xf32>
    %9 = arith.mulf %5, %8 : vector<24x8xf32>
    %10 = math.erf %9 : vector<24x8xf32>
    %cst_7 = arith.constant 1.000000e+00 : f32
    %11 = vector.broadcast %cst_7 : f32 to vector<24x8xf32>
    %12 = arith.addf %11, %10 : vector<24x8xf32>
    %13 = arith.mulf %7, %12 : vector<24x8xf32>
    %c0_8 = arith.constant 0 : index
    %c0_9 = arith.constant 0 : index
    %14 = vector.load %arg4[%c0_8, %c0_9] : memref<16x24xf32, #tpu.memory_space<vmem>>, vector<16x24xf32>
    %cst_10 = arith.constant dense<0.000000e+00> : vector<16x8xf32>
    %15 = tpu.matmul %14, %13, %cst_10 {dimension_numbers = #tpu.dot_dimension_numbers<[1], [0], [0], [1], [0, 0, 1, 1], [], []>} : vector<16x24xf32>, vector<24x8xf32>, vector<16x8xf32> -> vector<16x8xf32>
    %c0_11 = arith.constant 0 : index
    %c0_12 = arith.constant 0 : index
    %16 = vector.load %arg5[%c0_11, %c0_12] : memref<16x1xf32, #tpu.memory_space<vmem>>, vector<16x1xf32>
    %17 = vector.broadcast %16 : vector<16x1xf32> to vector<16x8xf32>
    %18 = arith.addf %15, %17 : vector<16x8xf32>
    %cst_13 = arith.constant 5.000000e-01 : f32
    %19 = vector.broadcast %cst_13 : f32 to vector<16x8xf32>
    %20 = arith.mulf %19, %18 : vector<16x8xf32>
    %cst_14 = arith.constant 0.707106769 : f32
    %21 = vector.broadcast %cst_14 : f32 to vector<16x8xf32>
    %22 = arith.mulf %18, %21 : vector<16x8xf32>
    %23 = math.erf %22 : vector<16x8xf32>
    %cst_15 = arith.constant 1.000000e+00 : f32
    %24 = vector.broadcast %cst_15 : f32 to vector<16x8xf32>
    %25 = arith.addf %24, %23 : vector<16x8xf32>
    %26 = arith.mulf %20, %25 : vector<16x8xf32>
    %c0_16 = arith.constant 0 : index
    %c0_17 = arith.constant 0 : index
    %27 = vector.load %arg6[%c0_16, %c0_17] : memref<8x16xf32, #tpu.memory_space<vmem>>, vector<8x16xf32>
    %cst_18 = arith.constant dense<0.000000e+00> : vector<8x8xf32>
    %28 = tpu.matmul %27, %26, %cst_18 {dimension_numbers = #tpu.dot_dimension_numbers<[1], [0], [0], [1], [0, 0, 1, 1], [], []>} : vector<8x16xf32>, vector<16x8xf32>, vector<8x8xf32> -> vector<8x8xf32>
    %c0_19 = arith.constant 0 : index
    %c0_20 = arith.constant 0 : index
    %29 = vector.load %arg7[%c0_19, %c0_20] : memref<8x1xf32, #tpu.memory_space<vmem>>, vector<8x1xf32>
    %30 = vector.broadcast %29 : vector<8x1xf32> to vector<8x8xf32>
    %31 = arith.addf %28, %30 : vector<8x8xf32>
    %cst_21 = arith.constant 5.000000e-01 : f32
    %32 = vector.broadcast %cst_21 : f32 to vector<8x8xf32>
    %33 = arith.mulf %32, %31 : vector<8x8xf32>
    %cst_22 = arith.constant 0.707106769 : f32
    %34 = vector.broadcast %cst_22 : f32 to vector<8x8xf32>
    %35 = arith.mulf %31, %34 : vector<8x8xf32>
    %36 = math.erf %35 : vector<8x8xf32>
    %cst_23 = arith.constant 1.000000e+00 : f32
    %37 = vector.broadcast %cst_23 : f32 to vector<8x8xf32>
    %38 = arith.addf %37, %36 : vector<8x8xf32>
    %39 = arith.mulf %33, %38 : vector<8x8xf32>
    %c0_24 = arith.constant 0 : index
    %c0_25 = arith.constant 0 : index
    %40 = vector.load %arg8[%c0_24, %c0_25] : memref<16x8xf32, #tpu.memory_space<vmem>>, vector<16x8xf32>
    %cst_26 = arith.constant dense<0.000000e+00> : vector<16x8xf32>
    %41 = tpu.matmul %40, %39, %cst_26 {dimension_numbers = #tpu.dot_dimension_numbers<[1], [0], [0], [1], [0, 0, 1, 1], [], []>} : vector<16x8xf32>, vector<8x8xf32>, vector<16x8xf32> -> vector<16x8xf32>
    %c0_27 = arith.constant 0 : index
    %c0_28 = arith.constant 0 : index
    %42 = vector.load %arg9[%c0_27, %c0_28] : memref<16x1xf32, #tpu.memory_space<vmem>>, vector<16x1xf32>
    %43 = vector.broadcast %42 : vector<16x1xf32> to vector<16x8xf32>
    %44 = arith.addf %41, %43 : vector<16x8xf32>
    %cst_29 = arith.constant 5.000000e-01 : f32
    %45 = vector.broadcast %cst_29 : f32 to vector<16x8xf32>
    %46 = arith.mulf %45, %44 : vector<16x8xf32>
    %cst_30 = arith.constant 0.707106769 : f32
    %47 = vector.broadcast %cst_30 : f32 to vector<16x8xf32>
    %48 = arith.mulf %44, %47 : vector<16x8xf32>
    %49 = math.erf %48 : vector<16x8xf32>
    %cst_31 = arith.constant 1.000000e+00 : f32
    %50 = vector.broadcast %cst_31 : f32 to vector<16x8xf32>
    %51 = arith.addf %50, %49 : vector<16x8xf32>
    %52 = arith.mulf %46, %51 : vector<16x8xf32>
    %c0_32 = arith.constant 0 : index
    %c0_33 = arith.constant 0 : index
    %53 = vector.load %arg10[%c0_32, %c0_33] : memref<32x8xf32, #tpu.memory_space<vmem>>, vector<16x8xf32>
    tpu.vector_store %arg10[%c0_32, %c0_33], %52 {strides = array<i32>} : memref<32x8xf32, #tpu.memory_space<vmem>>, vector<16x8xf32>,
    %c16 = arith.constant 16 : index
    %c0_34 = arith.constant 0 : index
    %54 = vector.load %arg10[%c16, %c0_34] : memref<32x8xf32, #tpu.memory_space<vmem>>, vector<16x8xf32>
    tpu.vector_store %arg10[%c16, %c0_34], %26 {strides = array<i32>} : memref<32x8xf32, #tpu.memory_space<vmem>>, vector<16x8xf32>,
    return
  }
  func.func @transform_0(%arg0: i32) -> (i32, i32) {
    %c0_i32 = arith.constant 0 : i32
    %c0_i32_0 = arith.constant 0 : i32
    return %arg0, %c0_i32 : i32, i32
  }
  func.func @transform_1(%arg0: i32) -> (i32, i32) {
    %c0_i32 = arith.constant 0 : i32
    %c0_i32_0 = arith.constant 0 : i32
    %c0_i32_1 = arith.constant 0 : i32
    return %c0_i32, %c0_i32_0 : i32, i32
  }
  func.func @transform_2(%arg0: i32) -> (i32, i32) {
    %c0_i32 = arith.constant 0 : i32
    %c0_i32_0 = arith.constant 0 : i32
    %c0_i32_1 = arith.constant 0 : i32
    return %c0_i32, %c0_i32_0 : i32, i32
  }
  func.func @transform_3(%arg0: i32) -> (i32, i32) {
    %c0_i32 = arith.constant 0 : i32
    %c0_i32_0 = arith.constant 0 : i32
    %c0_i32_1 = arith.constant 0 : i32
    return %c0_i32, %c0_i32_0 : i32, i32
  }
  func.func @transform_4(%arg0: i32) -> (i32, i32) {
    %c0_i32 = arith.constant 0 : i32
    %c0_i32_0 = arith.constant 0 : i32
    %c0_i32_1 = arith.constant 0 : i32
    return %c0_i32, %c0_i32_0 : i32, i32
  }
  func.func @transform_5(%arg0: i32) -> (i32, i32) {
    %c0_i32 = arith.constant 0 : i32
    %c0_i32_0 = arith.constant 0 : i32
    %c0_i32_1 = arith.constant 0 : i32
    return %c0_i32, %c0_i32_0 : i32, i32
  }
  func.func @transform_6(%arg0: i32) -> (i32, i32) {
    %c0_i32 = arith.constant 0 : i32
    %c0_i32_0 = arith.constant 0 : i32
    %c0_i32_1 = arith.constant 0 : i32
    return %c0_i32, %c0_i32_0 : i32, i32
  }
  func.func @transform_7(%arg0: i32) -> (i32, i32) {
    %c0_i32 = arith.constant 0 : i32
    %c0_i32_0 = arith.constant 0 : i32
    %c0_i32_1 = arith.constant 0 : i32
    return %c0_i32, %c0_i32_0 : i32, i32
  }
  func.func @transform_8(%arg0: i32) -> (i32, i32) {
    %c0_i32 = arith.constant 0 : i32
    %c0_i32_0 = arith.constant 0 : i32
    %c0_i32_1 = arith.constant 0 : i32
    return %c0_i32, %c0_i32_0 : i32, i32
  }
  func.func @transform_9(%arg0: i32) -> (i32, i32) {
    %c0_i32 = arith.constant 0 : i32
    %c0_i32_0 = arith.constant 0 : i32
    return %c0_i32, %arg0 : i32, i32
  }
}

</mosaic_0001>

<llo_original>
// kernel: concept_autoencoder_forward.1
$region0: #{concept_autoencoder_forward.1}
  #allocation0 [shape = 'u32[]', space=smem, size = 0x4, offset = 0x4, fixed_abs, tag = 'smem constant byte address 0x4 - core index']
  #allocation1 [shape = 'u32[144,128]{1,0:T(1,128)}', space=vmem, size = 0x12000, scoped, tag = 'internal scratch']
  %s0 = inlined_call_operand.vmem [shape: f32[8,16], index: 0, kind: input, shape index: {}]
  %s1 = inlined_call_operand.vmem [shape: f32[24,16], index: 1, kind: input, shape index: {}]
  %s2 = inlined_call_operand.vmem [shape: f32[24,1], index: 2, kind: input, shape index: {}]
  %s3 = inlined_call_operand.vmem [shape: f32[16,24], index: 3, kind: input, shape index: {}]
  %s4 = inlined_call_operand.vmem [shape: f32[16,1], index: 4, kind: input, shape index: {}]
  %s5 = inlined_call_operand.vmem [shape: f32[8,16], index: 5, kind: input, shape index: {}]
  %s6 = inlined_call_operand.vmem [shape: f32[8,1], index: 6, kind: input, shape index: {}]
  %s7 = inlined_call_operand.vmem [shape: f32[16,8], index: 7, kind: input, shape index: {}]
  %s8 = inlined_call_operand.vmem [shape: f32[16,1], index: 8, kind: input, shape index: {}]
  %s9 = inlined_call_operand.vmem [shape: f32[32,8], index: 9, kind: output, shape index: {}]
  %s10 = sld [smem:[#allocation0]]
  $region46: #{concept_autoencoder_forward.1} parent=0
    _
  %s12 = ssub.s32 1, %s10
  %s13 = scalar_select 0, %s12, %s10
  // Predicated region
  $region2: #{concept_autoencoder_forward.1} parent=0 // pred_check
    _
  $region3: #{concept_autoencoder_forward.1} parent=0 // pred_check_branch
    %15 = sbr.rel (0) target = $region5
  $region4: #{concept_autoencoder_forward.1} parent=0 // pred_region
    _
  $region5: #{concept_autoencoder_forward.1} parent=0 // pred_fallthru
    _
  // Predicated region
  $region6: #{concept_autoencoder_forward.1} parent=0 // pred_check
    _
  $region7: #{concept_autoencoder_forward.1} parent=0 // pred_check_branch
    %17 = sbr.rel (0) target = $region9
  $region8: #{concept_autoencoder_forward.1} parent=0 // pred_region
    _
  $region9: #{concept_autoencoder_forward.1} parent=0 // pred_fallthru
    _
  // Predicated region
  $region10: #{concept_autoencoder_forward.1} parent=0 // pred_check
    _
  $region11: #{concept_autoencoder_forward.1} parent=0 // pred_check_branch
    %19 = sbr.rel (0) target = $region13
  $region12: #{concept_autoencoder_forward.1} parent=0 // pred_region
    _
  $region13: #{concept_autoencoder_forward.1} parent=0 // pred_fallthru
    _
  // Predicated region
  $region14: #{concept_autoencoder_forward.1} parent=0 // pred_check
    _
  $region15: #{concept_autoencoder_forward.1} parent=0 // pred_check_branch
    %21 = sbr.rel (0) target = $region17
  $region16: #{concept_autoencoder_forward.1} parent=0 // pred_region
    _
  $region17: #{concept_autoencoder_forward.1} parent=0 // pred_fallthru
    _
  // Predicated region
  $region18: #{concept_autoencoder_forward.1} parent=0 // pred_check
    _
  $region19: #{concept_autoencoder_forward.1} parent=0 // pred_check_branch
    %23 = sbr.rel (0) target = $region21
  $region20: #{concept_autoencoder_forward.1} parent=0 // pred_region
    _
  $region21: #{concept_autoencoder_forward.1} parent=0 // pred_fallthru
    _
  // Predicated region
  $region22: #{concept_autoencoder_forward.1} parent=0 // pred_check
    _
  $region23: #{concept_autoencoder_forward.1} parent=0 // pred_check_branch
    %25 = sbr.rel (0) target = $region25
  $region24: #{concept_autoencoder_forward.1} parent=0 // pred_region
    _
  $region25: #{concept_autoencoder_forward.1} parent=0 // pred_fallthru
    _
  // Predicated region
  $region26: #{concept_autoencoder_forward.1} parent=0 // pred_check
    _
  $region27: #{concept_autoencoder_forward.1} parent=0 // pred_check_branch
    %27 = sbr.rel (0) target = $region29
  $region28: #{concept_autoencoder_forward.1} parent=0 // pred_region
    _
  $region29: #{concept_autoencoder_forward.1} parent=0 // pred_fallthru
    _
  // Predicated region
  $region30: #{concept_autoencoder_forward.1} parent=0 // pred_check
    _
  $region31: #{concept_autoencoder_forward.1} parent=0 // pred_check_branch
    %29 = sbr.rel (0) target = $region33
  $region32: #{concept_autoencoder_forward.1} parent=0 // pred_region
    _
  $region33: #{concept_autoencoder_forward.1} parent=0 // pred_fallthru
    _
  // Predicated region
  $region34: #{concept_autoencoder_forward.1} parent=0 // pred_check
    _
  $region35: #{concept_autoencoder_forward.1} parent=0 // pred_check_branch
    %31 = sbr.rel (0) target = $region37
  $region36: #{concept_autoencoder_forward.1} parent=0 // pred_region
    _
  $region37: #{concept_autoencoder_forward.1} parent=0 // pred_fallthru
    _
  %v32 = vld [vmem:[%s0] sm:$0xff]
  %v33 = vld [vmem:[%s1] sm:$0xff]
  %v34 = vld [vmem:[%s1 + $0x8] sm:$0xff]
  %v35 = vld [vmem:[%s1 + $0x10] sm:$0xff]
  %v36 = vld [vmem:[%s2] sm:$0xff]
  %v37 = vld [vmem:[%s2 + $0x8] sm:$0xff]
  %v38 = vld [vmem:[%s2 + $0x10] sm:$0xff]
  %40 = vset.pattern.permute.xlu0 0
  %41 = vperm.xlu0 %40, %v36
  %v42 = vpop.permute.xlu0 %41
  %45 = vset.pattern.permute.xlu0 0
  %46 = vperm.xlu0 %45, %v37
  %v47 = vpop.permute.xlu0 %46
  %50 = vset.pattern.permute.xlu0 0
  %51 = vperm.xlu0 %50, %v38
  %v52 = vpop.permute.xlu0 %51
  %vm54 = vcmask 130048
  %v56 = vsel %vm54, %v33, 0
  %v59 = vsel %vm54, %v34, 0
  %v62 = vsel %vm54, %v35, 0
  %v65 = vsel %vm54, %v32, 0
  %67 = vmatprep.subr.mxu0 0.0
  %68 = vmatpush1.xpose.msra.mxu0 0.0
  %69 = vmatprep.subr.mxu0 0.0
  %70 = vmatpush1.xpose.msra.mxu0 0.0
  %71 = vmatprep.subr.mxu0 0.0
  %72 = vmatpush1.xpose.msra.mxu0 0.0
  %73 = vmatprep.subr.mxu0 0.0
  %74 = vmatpush1.xpose.msra.mxu0 0.0
  %75 = vmatprep.subr.mxu0 0.0
  %76 = vmatpush1.xpose.msra.mxu0 0.0
  %77 = vmatprep.subr.mxu0 0.0
  %78 = vmatpush1.xpose.msra.mxu0 0.0
  %79 = vmatprep.subr.mxu0 0.0
  %80 = vmatpush1.xpose.msra.mxu0 0.0
  %81 = vmatprep.subr.mxu0 0.0
  %82 = vmatpush1.xpose.msra.mxu0 0.0
  %83 = vmatprep.subr.mxu0 0.0
  %84 = vmatpush1.xpose.msra.mxu0 0.0
  %85 = vmatprep.subr.mxu0 0.0
  %86 = vmatpush1.xpose.msra.mxu0 0.0
  %87 = vmatprep.subr.mxu0 0.0
  %88 = vmatpush1.xpose.msra.mxu0 0.0
  %89 = vmatprep.subr.mxu0 0.0
  %90 = vmatpush1.xpose.msra.mxu0 0.0
  %91 = vmatprep.subr.mxu0 0.0
  %92 = vmatpush1.xpose.msra.mxu0 0.0
  %93 = vmatprep.subr.mxu0 0.0
  %94 = vmatpush1.xpose.msra.mxu0 0.0
  %95 = vmatprep.subr.mxu0 0.0
  %96 = vmatpush1.xpose.msra.mxu0 0.0
  %97 = vmatprep.subr.mxu0 0.0
  %98 = vmatpush1.xpose.msra.mxu0 %v65
  %99 = vmatprep.subr.mxu0 0.0
  %100 = vmatpush2.xpose.msra.mxu0 0.0
  %101 = vmatprep.subr.mxu0 0.0
  %102 = vmatpush2.xpose.msra.mxu0 0.0
  %103 = vmatprep.subr.mxu0 0.0
  %104 = vmatpush2.xpose.msra.mxu0 0.0
  %105 = vmatprep.subr.mxu0 0.0
  %106 = vmatpush2.xpose.msra.mxu0 0.0
  %107 = vmatprep.subr.mxu0 0.0
  %108 = vmatpush2.xpose.msra.mxu0 0.0
  %109 = vmatprep.subr.mxu0 0.0
  %110 = vmatpush2.xpose.msra.mxu0 0.0
  %111 = vmatprep.subr.mxu0 0.0
  %112 = vmatpush2.xpose.msra.mxu0 0.0
  %113 = vmatprep.subr.mxu0 0.0
  %114 = vmatpush2.xpose.msra.mxu0 0.0
  %115 = vmatprep.subr.mxu0 0.0
  %116 = vmatpush2.xpose.msra.mxu0 0.0
  %117 = vmatprep.subr.mxu0 0.0
  %118 = vmatpush2.xpose.msra.mxu0 0.0
  %119 = vmatprep.subr.mxu0 0.0
  %120 = vmatpush2.xpose.msra.mxu0 0.0
  %121 = vmatprep.subr.mxu0 0.0
  %122 = vmatpush2.xpose.msra.mxu0 0.0
  %123 = vmatprep.subr.mxu0 0.0
  %124 = vmatpush2.xpose.msra.mxu0 0.0
  %125 = vmatprep.subr.mxu0 0.0
  %126 = vmatpush2.xpose.msra.mxu0 0.0
  %127 = vmatprep.subr.mxu0 0.0
  %128 = vmatpush2.xpose.msra.mxu0 0.0
  %129 = vmatprep.subr.mxu0 0.0
  %130 = vmatpush2.xpose.msra.mxu0 0.0
  %131 = vmatprep.mubr.f32.mxu0 0.0
  %132 = vmatmul.mubr.f32.gmra.mxu0 %v56
  %v133 = vpop.f32.mrf.mxu0
  %v134 = vadd.f32 %v42, %v133
  %v135 = vpop.f32.mrf.mxu0
  %136 = vmatprep.mubr.f32.mxu0 0.0
  %137 = vmatmul.mubr.f32.gmra.mxu0 %v59
  %v138 = vpop.f32.mrf.mxu0
  %v139 = vadd.f32 %v47, %v138
  %v140 = vpop.f32.mrf.mxu0
  %141 = vmatprep.mubr.f32.mxu0 0.0
  %142 = vmatmul.mubr.f32.gmra.mxu0 %v62
  %v143 = vpop.f32.mrf.mxu0
  %v144 = vadd.f32 %v52, %v143
  %v145 = vpop.f32.mrf.mxu0
  %146 = vdwg.mxu0
  %v147 = vmul.f32 %v134, 0.5
  %v148 = vmul.f32 %v139, 0.5
  %v149 = vmul.f32 %v144, 0.5
  %v150 = vmul.f32 %v134, 0.70710677
  %v151 = vmul.f32 %v139, 0.70710677
  %v152 = vmul.f32 %v144, 0.70710677
  %v153 = verf.f32.pop %v150
  %v154 = verf.f32.pop %v151
  %v155 = verf.f32.pop %v152
  %v156 = vadd.f32 %v153, 1.0
  %v157 = vadd.f32 %v154, 1.0
  %v158 = vadd.f32 %v155, 1.0
  %v159 = vmul.f32 %v147, %v156
  %v160 = vmul.f32 %v148, %v157
  %v161 = vmul.f32 %v149, %v158
  %v162 = vld [vmem:[%s3] sm:$0xff]
  %v163 = vld [vmem:[%s3 + $0x8] sm:$0xff]
  %v164 = vld [vmem:[%s4] sm:$0xff]
  %v165 = vld [vmem:[%s4 + $0x8] sm:$0xff]
  %167 = vset.pattern.permute.xlu0 0
  %168 = vperm.xlu0 %167, %v164
  %v169 = vpop.permute.xlu0 %168
  %172 = vset.pattern.permute.xlu0 0
  %173 = vperm.xlu0 %172, %v165
  %v174 = vpop.permute.xlu0 %173
  %vm176 = vcmask 195584
  %v178 = vsel %vm176, %v162, 0
  %v181 = vsel %vm176, %v163, 0
  %183 = vmatprep.subr.mxu0 0.0
  %184 = vmatpush1.msra.mxu0 0.0
  %185 = vmatprep.subr.mxu0 0.0
  %186 = vmatpush1.msra.mxu0 0.0
  %187 = vmatprep.subr.mxu0 0.0
  %188 = vmatpush1.msra.mxu0 0.0
  %189 = vmatprep.subr.mxu0 0.0
  %190 = vmatpush1.msra.mxu0 0.0
  %191 = vmatprep.subr.mxu0 0.0
  %192 = vmatpush1.msra.mxu0 0.0
  %193 = vmatprep.subr.mxu0 0.0
  %194 = vmatpush1.msra.mxu0 0.0
  %195 = vmatprep.subr.mxu0 0.0
  %196 = vmatpush1.msra.mxu0 0.0
  %197 = vmatprep.subr.mxu0 0.0
  %198 = vmatpush1.msra.mxu0 0.0
  %199 = vmatprep.subr.mxu0 0.0
  %200 = vmatpush1.msra.mxu0 0.0
  %201 = vmatprep.subr.mxu0 0.0
  %202 = vmatpush1.msra.mxu0 0.0
  %203 = vmatprep.subr.mxu0 0.0
  %204 = vmatpush1.msra.mxu0 0.0
  %205 = vmatprep.subr.mxu0 0.0
  %206 = vmatpush1.msra.mxu0 0.0
  %207 = vmatprep.subr.mxu0 0.0
  %208 = vmatpush1.msra.mxu0 0.0
  %209 = vmatprep.subr.mxu0 0.0
  %210 = vmatpush1.msra.mxu0 %v161
  %211 = vmatprep.subr.mxu0 0.0
  %212 = vmatpush1.msra.mxu0 %v160
  %213 = vmatprep.subr.mxu0 0.0
  %214 = vmatpush1.msra.mxu0 %v159
  %215 = vmatprep.subr.mxu0 0.0
  %216 = vmatpush2.msra.mxu0 0.0
  %217 = vmatprep.subr.mxu0 0.0
  %218 = vmatpush2.msra.mxu0 0.0
  %219 = vmatprep.subr.mxu0 0.0
  %220 = vmatpush2.msra.mxu0 0.0
  %221 = vmatprep.subr.mxu0 0.0
  %222 = vmatpush2.msra.mxu0 0.0
  %223 = vmatprep.subr.mxu0 0.0
  %224 = vmatpush2.msra.mxu0 0.0
  %225 = vmatprep.subr.mxu0 0.0
  %226 = vmatpush2.msra.mxu0 0.0
  %227 = vmatprep.subr.mxu0 0.0
  %228 = vmatpush2.msra.mxu0 0.0
  %229 = vmatprep.subr.mxu0 0.0
  %230 = vmatpush2.msra.mxu0 0.0
  %231 = vmatprep.subr.mxu0 0.0
  %232 = vmatpush2.msra.mxu0 0.0
  %233 = vmatprep.subr.mxu0 0.0
  %234 = vmatpush2.msra.mxu0 0.0
  %235 = vmatprep.subr.mxu0 0.0
  %236 = vmatpush2.msra.mxu0 0.0
  %237 = vmatprep.subr.mxu0 0.0
  %238 = vmatpush2.msra.mxu0 0.0
  %239 = vmatprep.subr.mxu0 0.0
  %240 = vmatpush2.msra.mxu0 0.0
  %241 = vmatprep.subr.mxu0 0.0
  %242 = vmatpush2.msra.mxu0 0.0
  %243 = vmatprep.subr.mxu0 0.0
  %244 = vmatpush2.msra.mxu0 0.0
  %245 = vmatprep.subr.mxu0 0.0
  %246 = vmatpush2.msra.mxu0 0.0
  %247 = vmatprep.mubr.f32.mxu0 0.0
  %248 = vmatmul.mubr.f32.gmra.mxu0 %v178
  %v249 = vpop.f32.mrf.mxu0
  %v250 = vadd.f32 %v169, %v249
  %v251 = vpop.f32.mrf.mxu0
  %252 = vmatprep.mubr.f32.mxu0 0.0
  %253 = vmatmul.mubr.f32.gmra.mxu0 %v181
  %v254 = vpop.f32.mrf.mxu0
  %v255 = vadd.f32 %v174, %v254
  %v256 = vpop.f32.mrf.mxu0
  %257 = vdwg.mxu0
  %v258 = vmul.f32 %v250, 0.5
  %v259 = vmul.f32 %v255, 0.5
  %v260 = vmul.f32 %v250, 0.70710677
  %v261 = vmul.f32 %v255, 0.70710677
  %v262 = verf.f32.pop %v260
  %v263 = verf.f32.pop %v261
  %v264 = vadd.f32 %v262, 1.0
  %v265 = vadd.f32 %v263, 1.0
  %v266 = vmul.f32 %v258, %v264
  %v267 = vmul.f32 %v259, %v265
  %v268 = vld [vmem:[%s5] sm:$0xff]
  %v269 = vld [vmem:[%s6] sm:$0xff]
  %271 = vset.pattern.permute.xlu0 0
  %272 = vperm.xlu0 %271, %v269
  %v273 = vpop.permute.xlu0 %272
  %v276 = vsel %vm54, %v268, 0
  %278 = vmatprep.subr.mxu0 0.0
  %279 = vmatpush1.msra.mxu0 0.0
  %280 = vmatprep.subr.mxu0 0.0
  %281 = vmatpush1.msra.mxu0 0.0
  %282 = vmatprep.subr.mxu0 0.0
  %283 = vmatpush1.msra.mxu0 0.0
  %284 = vmatprep.subr.mxu0 0.0
  %285 = vmatpush1.msra.mxu0 0.0
  %286 = vmatprep.subr.mxu0 0.0
  %287 = vmatpush1.msra.mxu0 0.0
  %288 = vmatprep.subr.mxu0 0.0
  %289 = vmatpush1.msra.mxu0 0.0
  %290 = vmatprep.subr.mxu0 0.0
  %291 = vmatpush1.msra.mxu0 0.0
  %292 = vmatprep.subr.mxu0 0.0
  %293 = vmatpush1.msra.mxu0 0.0
  %294 = vmatprep.subr.mxu0 0.0
  %295 = vmatpush1.msra.mxu0 0.0
  %296 = vmatprep.subr.mxu0 0.0
  %297 = vmatpush1.msra.mxu0 0.0
  %298 = vmatprep.subr.mxu0 0.0
  %299 = vmatpush1.msra.mxu0 0.0
  %300 = vmatprep.subr.mxu0 0.0
  %301 = vmatpush1.msra.mxu0 0.0
  %302 = vmatprep.subr.mxu0 0.0
  %303 = vmatpush1.msra.mxu0 0.0
  %304 = vmatprep.subr.mxu0 0.0
  %305 = vmatpush1.msra.mxu0 0.0
  %306 = vmatprep.subr.mxu0 0.0
  %307 = vmatpush1.msra.mxu0 %v267
  %308 = vmatprep.subr.mxu0 0.0
  %309 = vmatpush1.msra.mxu0 %v266
  %310 = vmatprep.subr.mxu0 0.0
  %311 = vmatpush2.msra.mxu0 0.0
  %312 = vmatprep.subr.mxu0 0.0
  %313 = vmatpush2.msra.mxu0 0.0
  %314 = vmatprep.subr.mxu0 0.0
  %315 = vmatpush2.msra.mxu0 0.0
  %316 = vmatprep.subr.mxu0 0.0
  %317 = vmatpush2.msra.mxu0 0.0
  %318 = vmatprep.subr.mxu0 0.0
  %319 = vmatpush2.msra.mxu0 0.0
  %320 = vmatprep.subr.mxu0 0.0
  %321 = vmatpush2.msra.mxu0 0.0
  %322 = vmatprep.subr.mxu0 0.0
  %323 = vmatpush2.msra.mxu0 0.0
  %324 = vmatprep.subr.mxu0 0.0
  %325 = vmatpush2.msra.mxu0 0.0
  %326 = vmatprep.subr.mxu0 0.0
  %327 = vmatpush2.msra.mxu0 0.0
  %328 = vmatprep.subr.mxu0 0.0
  %329 = vmatpush2.msra.mxu0 0.0
  %330 = vmatprep.subr.mxu0 0.0
  %331 = vmatpush2.msra.mxu0 0.0
  %332 = vmatprep.subr.mxu0 0.0
  %333 = vmatpush2.msra.mxu0 0.0
  %334 = vmatprep.subr.mxu0 0.0
  %335 = vmatpush2.msra.mxu0 0.0
  %336 = vmatprep.subr.mxu0 0.0
  %337 = vmatpush2.msra.mxu0 0.0
  %338 = vmatprep.subr.mxu0 0.0
  %339 = vmatpush2.msra.mxu0 0.0
  %340 = vmatprep.subr.mxu0 0.0
  %341 = vmatpush2.msra.mxu0 0.0
  %342 = vmatprep.mubr.f32.mxu0 0.0
  %343 = vmatmul.mubr.f32.gmra.mxu0 %v276
  %v344 = vpop.f32.mrf.mxu0
  %v345 = vadd.f32 %v273, %v344
  %v346 = vpop.f32.mrf.mxu0
  %347 = vdwg.mxu0
  %v348 = vmul.f32 %v345, 0.5
  %v349 = vmul.f32 %v345, 0.70710677
  %v350 = verf.f32.pop %v349
  %v351 = vadd.f32 %v350, 1.0
  %v352 = vmul.f32 %v348, %v351
  %v353 = vld [vmem:[%s7] sm:$0xff]
  %v354 = vld [vmem:[%s7 + $0x8] sm:$0xff]
  %v355 = vld [vmem:[%s8] sm:$0xff]
  %v356 = vld [vmem:[%s8 + $0x8] sm:$0xff]
  %358 = vset.pattern.permute.xlu0 0
  %359 = vperm.xlu0 %358, %v355
  %v360 = vpop.permute.xlu0 %359
  %363 = vset.pattern.permute.xlu0 0
  %364 = vperm.xlu0 %363, %v356
  %v365 = vpop.permute.xlu0 %364
  %vm367 = vcmask 64512
  %v369 = vsel %vm367, %v353, 0
  %v372 = vsel %vm367, %v354, 0
  %374 = vmatprep.subr.mxu0 0.0
  %375 = vmatpush1.msra.mxu0 0.0
  %376 = vmatprep.subr.mxu0 0.0
  %377 = vmatpush1.msra.mxu0 0.0
  %378 = vmatprep.subr.mxu0 0.0
  %379 = vmatpush1.msra.mxu0 0.0
  %380 = vmatprep.subr.mxu0 0.0
  %381 = vmatpush1.msra.mxu0 0.0
  %382 = vmatprep.subr.mxu0 0.0
  %383 = vmatpush1.msra.mxu0 0.0
  %384 = vmatprep.subr.mxu0 0.0
  %385 = vmatpush1.msra.mxu0 0.0
  %386 = vmatprep.subr.mxu0 0.0
  %387 = vmatpush1.msra.mxu0 0.0
  %388 = vmatprep.subr.mxu0 0.0
  %389 = vmatpush1.msra.mxu0 0.0
  %390 = vmatprep.subr.mxu0 0.0
  %391 = vmatpush1.msra.mxu0 0.0
  %392 = vmatprep.subr.mxu0 0.0
  %393 = vmatpush1.msra.mxu0 0.0
  %394 = vmatprep.subr.mxu0 0.0
  %395 = vmatpush1.msra.mxu0 0.0
  %396 = vmatprep.subr.mxu0 0.0
  %397 = vmatpush1.msra.mxu0 0.0
  %398 = vmatprep.subr.mxu0 0.0
  %399 = vmatpush1.msra.mxu0 0.0
  %400 = vmatprep.subr.mxu0 0.0
  %401 = vmatpush1.msra.mxu0 0.0
  %402 = vmatprep.subr.mxu0 0.0
  %403 = vmatpush1.msra.mxu0 0.0
  %404 = vmatprep.subr.mxu0 0.0
  %405 = vmatpush1.msra.mxu0 %v352
  %406 = vmatprep.subr.mxu0 0.0
  %407 = vmatpush2.msra.mxu0 0.0
  %408 = vmatprep.subr.mxu0 0.0
  %409 = vmatpush2.msra.mxu0 0.0
  %410 = vmatprep.subr.mxu0 0.0
  %411 = vmatpush2.msra.mxu0 0.0
  %412 = vmatprep.subr.mxu0 0.0
  %413 = vmatpush2.msra.mxu0 0.0
  %414 = vmatprep.subr.mxu0 0.0
  %415 = vmatpush2.msra.mxu0 0.0
  %416 = vmatprep.subr.mxu0 0.0
  %417 = vmatpush2.msra.mxu0 0.0
  %418 = vmatprep.subr.mxu0 0.0
  %419 = vmatpush2.msra.mxu0 0.0
  %420 = vmatprep.subr.mxu0 0.0
  %421 = vmatpush2.msra.mxu0 0.0
  %422 = vmatprep.subr.mxu0 0.0
  %423 = vmatpush2.msra.mxu0 0.0
  %424 = vmatprep.subr.mxu0 0.0
  %425 = vmatpush2.msra.mxu0 0.0
  %426 = vmatprep.subr.mxu0 0.0
  %427 = vmatpush2.msra.mxu0 0.0
  %428 = vmatprep.subr.mxu0 0.0
  %429 = vmatpush2.msra.mxu0 0.0
  %430 = vmatprep.subr.mxu0 0.0
  %431 = vmatpush2.msra.mxu0 0.0
  %432 = vmatprep.subr.mxu0 0.0
  %433 = vmatpush2.msra.mxu0 0.0
  %434 = vmatprep.subr.mxu0 0.0
  %435 = vmatpush2.msra.mxu0 0.0
  %436 = vmatprep.subr.mxu0 0.0
  %437 = vmatpush2.msra.mxu0 0.0
  %438 = vmatprep.mubr.f32.mxu0 0.0
  %439 = vmatmul.mubr.f32.gmra.mxu0 %v369
  %v440 = vpop.f32.mrf.mxu0
  %v441 = vadd.f32 %v360, %v440
  %v442 = vpop.f32.mrf.mxu0
  %443 = vmatprep.mubr.f32.mxu0 0.0
  %444 = vmatmul.mubr.f32.gmra.mxu0 %v372
  %v445 = vpop.f32.mrf.mxu0
  %v446 = vadd.f32 %v365, %v445
  %v447 = vpop.f32.mrf.mxu0
  %448 = vdwg.mxu0
  %v449 = vmul.f32 %v441, 0.5
  %v450 = vmul.f32 %v446, 0.5
  %v451 = vmul.f32 %v441, 0.70710677
  %v452 = vmul.f32 %v446, 0.70710677
  %v453 = verf.f32.pop %v451
  %v454 = verf.f32.pop %v452
  %v455 = vadd.f32 %v453, 1.0
  %v456 = vadd.f32 %v454, 1.0
  %v457 = vmul.f32 %v449, %v455
  %v458 = vmul.f32 %v450, %v456
  %459 = vst.msk [vmem:[%s9] sm:$0xff] %vm367, %v457
  %460 = vst.msk [vmem:[%s9 + $0x8] sm:$0xff] %vm367, %v458
  %461 = vst.msk [vmem:[%s9 + $0x10] sm:$0xff] %vm367, %v266
  %462 = vst.msk [vmem:[%s9 + $0x18] sm:$0xff] %vm367, %v267
  // Predicated region
  $region38: #{concept_autoencoder_forward.1} parent=0 // pred_check
    _
  $region39: #{concept_autoencoder_forward.1} parent=0 // pred_check_branch
    %464 = sbr.rel (0) target = $region41
  $region40: #{concept_autoencoder_forward.1} parent=0 // pred_region
    _
  $region41: #{concept_autoencoder_forward.1} parent=0 // pred_fallthru
    _
  // Predicated region
  $region42: #{concept_autoencoder_forward.1} parent=0 // pred_check
    _
  $region43: #{concept_autoencoder_forward.1} parent=0 // pred_check_branch
    %466 = sbr.rel (0) target = $region45
  $region44: #{concept_autoencoder_forward.1} parent=0 // pred_region
    _
  $region45: #{concept_autoencoder_forward.1} parent=0 // pred_fallthru
    _

</llo_original>
